<compile_context>
chip_gen: v5e
topology: v5e:2x2
jax: 0.10.0
libtpu: 0.0.40
codegen_flags: <defaults>
</compile_context>

<pallas_src>
import functools

import jax
import jax.numpy as jnp
from jax.experimental import pallas as pl
from jax.experimental.pallas import tpu as pltpu

LANE = 128  # TPU lane width; final layer is padded out to this many columns.


def mlp_logsoftmax_kernel(x_ref, w1_ref, b1_ref, w2_ref, b2_ref,
                          w3_ref, b3_ref, o_ref, *, matmul_dtype):
    # One (B_TILE, insize) tile of the batch; weights are VMEM-resident.
    x = x_ref[...]                                                     # (Bt, 3)

    h1 = jnp.dot(x.astype(matmul_dtype), w1_ref[...].astype(matmul_dtype),
                 preferred_element_type=jnp.float32)                   # (Bt, 64)
    h1 = jnp.maximum(h1 + b1_ref[...], 0.0)                            # f32 ReLU

    h2 = jnp.dot(h1.astype(matmul_dtype), w2_ref[...].astype(matmul_dtype),
                 preferred_element_type=jnp.float32)                   # (Bt, 128)
    h2 = jnp.maximum(h2 + b2_ref[...], 0.0)                            # f32 ReLU

    logits = jnp.dot(h2.astype(matmul_dtype), w3_ref[...].astype(matmul_dtype),
                     preferred_element_type=jnp.float32) + b3_ref[...]  # (Bt, 128)
    # Padded columns (>= outsize) carry a -1e30 bias: they never win the max
    # and exp() underflows to exactly 0, so the log-softmax of the real
    # columns is unaffected.

    m = jnp.max(logits, axis=-1, keepdims=True)
    shifted = logits - m
    lse = jnp.log(jnp.sum(jnp.exp(shifted), axis=-1, keepdims=True))
    o_ref[...] = shifted - lse                                          # lane-dense store


def _round_up(v, m):
    return (v + m - 1) // m * m


def simple_model_forward(x, params, *, block_b=512, matmul_dtype=jnp.float32):
    w1, b1, w2, b2, w3, b3 = params
    B, insize = x.shape
    outsize = w3.shape[1]

    # Pad the narrow last layer out to 128 lanes (zero weights, -1e30 bias).
    n_pad = LANE - outsize
    w3p = jnp.pad(w3, ((0, 0), (0, n_pad)))
    b3p = jnp.pad(b3, ((0, 0), (0, n_pad)), constant_values=-1e30)

    # Batch tiling + remainder padding.
    b_tile = min(block_b, _round_up(B, 8))
    b_padded = _round_up(B, b_tile)
    if b_padded != B:
        x = jnp.pad(x, ((0, b_padded - B), (0, 0)))
    grid = (b_padded // b_tile,)

    def resident(shape):
        # Same block every grid step -> weights stay in VMEM, DMA'd once.
        return pl.BlockSpec(shape, lambda i: (0, 0))

    kernel = functools.partial(mlp_logsoftmax_kernel, matmul_dtype=matmul_dtype)

    out = pl.pallas_call(
        kernel,
        out_shape=jax.ShapeDtypeStruct((b_padded, LANE), jnp.float32),
        grid=grid,
        in_specs=[
            pl.BlockSpec((b_tile, insize), lambda i: (i, 0)),   # x: pipelined tiles
            resident(w1.shape), resident(b1.shape),
            resident(w2.shape), resident(b2.shape),
            resident(w3p.shape), resident(b3p.shape),
        ],
        out_specs=pl.BlockSpec((b_tile, LANE), lambda i: (i, 0)),
        compiler_params=pltpu.CompilerParams(
            dimension_semantics=("parallel",),      # megacore split on v7x
            vmem_limit_bytes=32 * 1024 * 1024,      # explicit; fits v7x's 64 MiB
        ),
    )(x, w1, b1, w2, b2, w3p, b3p)

    return out[:B, :outsize]


def init_params(key, insize=3, outsize=8):
    """Deterministic init mirroring the torch Linear shapes.

    torch stores Linear weight as (out, in); we keep the transposed
    (in, out) layout so the kernel computes x @ W + b. Biases are (1, out)
    so they stay 2-D (lane-major) inside the kernel.
    """
    k1, k2, k3, k4, k5, k6 = jax.random.split(key, 6)

    def uniform_init(k, shape, fan_in):
        bound = 1.0 / jnp.sqrt(fan_in)
        return jax.random.uniform(k, shape, jnp.float32, -bound, bound)

    w1 = uniform_init(k1, (insize, 64), insize)
    b1 = uniform_init(k2, (1, 64), insize)
    w2 = uniform_init(k3, (64, 128), 64)
    b2 = uniform_init(k4, (1, 128), 64)
    w3 = uniform_init(k5, (128, outsize), 128)
    b3 = uniform_init(k6, (1, outsize), 128)
    return (w1, b1, w2, b2, w3, b3)


def reference_forward(x, params):
    w1, b1, w2, b2, w3, b3 = params
    h1 = jnp.maximum(x @ w1 + b1, 0.0)
    h2 = jnp.maximum(h1 @ w2 + b2, 0.0)
    logits = h2 @ w3 + b3
    return jax.nn.log_softmax(logits, axis=1)


if __name__ == "__main__":
    insize, outsize = 3, 8
    key = jax.random.PRNGKey(0)
    k_params, k_x1, k_x2 = jax.random.split(key, 3)
    params = init_params(k_params, insize=insize, outsize=outsize)

    # Small batch: single grid step, tight f32 check.
    x_small = jax.random.normal(k_x1, (16, insize), dtype=jnp.float32)
    out_small = jax.block_until_ready(simple_model_forward(x_small, params))
    ref_small = reference_forward(x_small, params)
    assert out_small.shape == (16, outsize)
    assert jnp.allclose(out_small, ref_small, atol=1e-5, rtol=1e-5)

    # Larger, non-multiple-of-tile batch: exercises the grid, resident weights,
    # and the remainder padding path.
    x_big = jax.random.normal(k_x2, (1000, insize), dtype=jnp.float32)
    out_big = jax.block_until_ready(
        simple_model_forward(x_big, params, block_b=512))
    ref_big = reference_forward(x_big, params)
    assert out_big.shape == (1000, outsize)
    assert jnp.allclose(out_big, ref_big, atol=1e-5, rtol=1e-5)

    # bf16 matmul operands / f32 accumulate (MXU fast path on v6e/v7x).
    out_bf16 = jax.block_until_ready(
        simple_model_forward(x_big, params, block_b=512,
                             matmul_dtype=jnp.bfloat16))
    assert out_bf16.shape == (1000, outsize)
    assert jnp.allclose(out_bf16, ref_big, atol=5e-2, rtol=5e-2)

    print("KERNEL_OK")
</pallas_src>

<mosaic_0001>
module attributes {stable_mosaic.version = 11 : i64} {
  func.func @mlp_logsoftmax_kernel(%arg0: i32, %arg1: memref<16x3xf32, #tpu.memory_space<vmem>>, %arg2: memref<3x64xf32, #tpu.memory_space<vmem>>, %arg3: memref<1x64xf32, #tpu.memory_space<vmem>>, %arg4: memref<64x128xf32, #tpu.memory_space<vmem>>, %arg5: memref<1x128xf32, #tpu.memory_space<vmem>>, %arg6: memref<128x128xf32, #tpu.memory_space<vmem>>, %arg7: memref<1x128xf32, #tpu.memory_space<vmem>>, %arg8: memref<16x128xf32, #tpu.memory_space<vmem>>) attributes {dimension_semantics = [#tpu.dimension_semantics<parallel>], iteration_bounds = array<i64: 1>, scalar_prefetch = 0 : i64, scratch_operands = 0 : i64, tpu.core_type = #tpu.core_type<tc>, window_params = [{transform_indices = @transform_0, window_bounds = array<i64: 16, 3>}, {pipeline_mode = #tpu.pipeline_mode<synchronous>, transform_indices = @transform_1, window_bounds = array<i64: 3, 64>}, {pipeline_mode = #tpu.pipeline_mode<synchronous>, transform_indices = @transform_2, window_bounds = array<i64: 1, 64>}, {pipeline_mode = #tpu.pipeline_mode<synchronous>, transform_indices = @transform_3, window_bounds = array<i64: 64, 128>}, {pipeline_mode = #tpu.pipeline_mode<synchronous>, transform_indices = @transform_4, window_bounds = array<i64: 1, 128>}, {pipeline_mode = #tpu.pipeline_mode<synchronous>, transform_indices = @transform_5, window_bounds = array<i64: 128, 128>}, {pipeline_mode = #tpu.pipeline_mode<synchronous>, transform_indices = @transform_6, window_bounds = array<i64: 1, 128>}, {transform_indices = @transform_7, window_bounds = array<i64: 16, 128>}]} {
    %c0 = arith.constant 0 : index
    %c0_0 = arith.constant 0 : index
    %0 = vector.load %arg1[%c0, %c0_0] : memref<16x3xf32, #tpu.memory_space<vmem>>, vector<16x3xf32>
    %c0_1 = arith.constant 0 : index
    %c0_2 = arith.constant 0 : index
    %1 = vector.load %arg2[%c0_1, %c0_2] : memref<3x64xf32, #tpu.memory_space<vmem>>, vector<3x64xf32>
    %cst = arith.constant dense<0.000000e+00> : vector<16x64xf32>
    %2 = tpu.matmul %0, %1, %cst {dimension_numbers = #tpu.dot_dimension_numbers<[1], [0], [0], [1], [0, 0, 1, 1], [], []>} : vector<16x3xf32>, vector<3x64xf32>, vector<16x64xf32> -> vector<16x64xf32>
    %c0_3 = arith.constant 0 : index
    %c0_4 = arith.constant 0 : index
    %3 = vector.load %arg3[%c0_3, %c0_4] : memref<1x64xf32, #tpu.memory_space<vmem>>, vector<1x64xf32>
    %4 = vector.broadcast %3 : vector<1x64xf32> to vector<16x64xf32>
    %5 = arith.addf %2, %4 : vector<16x64xf32>
    %cst_5 = arith.constant 0.000000e+00 : f32
    %6 = vector.broadcast %cst_5 : f32 to vector<16x64xf32>
    %7 = arith.maximumf %5, %6 : vector<16x64xf32>
    %c0_6 = arith.constant 0 : index
    %c0_7 = arith.constant 0 : index
    %8 = vector.load %arg4[%c0_6, %c0_7] : memref<64x128xf32, #tpu.memory_space<vmem>>, vector<64x128xf32>
    %cst_8 = arith.constant dense<0.000000e+00> : vector<16x128xf32>
    %9 = tpu.matmul %7, %8, %cst_8 {dimension_numbers = #tpu.dot_dimension_numbers<[1], [0], [0], [1], [0, 0, 1, 1], [], []>} : vector<16x64xf32>, vector<64x128xf32>, vector<16x128xf32> -> vector<16x128xf32>
    %c0_9 = arith.constant 0 : index
    %c0_10 = arith.constant 0 : index
    %10 = vector.load %arg5[%c0_9, %c0_10] : memref<1x128xf32, #tpu.memory_space<vmem>>, vector<1x128xf32>
    %11 = vector.broadcast %10 : vector<1x128xf32> to vector<16x128xf32>
    %12 = arith.addf %9, %11 : vector<16x128xf32>
    %cst_11 = arith.constant 0.000000e+00 : f32
    %13 = vector.broadcast %cst_11 : f32 to vector<16x128xf32>
    %14 = arith.maximumf %12, %13 : vector<16x128xf32>
    %c0_12 = arith.constant 0 : index
    %c0_13 = arith.constant 0 : index
    %15 = vector.load %arg6[%c0_12, %c0_13] : memref<128x128xf32, #tpu.memory_space<vmem>>, vector<128x128xf32>
    %cst_14 = arith.constant dense<0.000000e+00> : vector<16x128xf32>
    %16 = tpu.matmul %14, %15, %cst_14 {dimension_numbers = #tpu.dot_dimension_numbers<[1], [0], [0], [1], [0, 0, 1, 1], [], []>} : vector<16x128xf32>, vector<128x128xf32>, vector<16x128xf32> -> vector<16x128xf32>
    %c0_15 = arith.constant 0 : index
    %c0_16 = arith.constant 0 : index
    %17 = vector.load %arg7[%c0_15, %c0_16] : memref<1x128xf32, #tpu.memory_space<vmem>>, vector<1x128xf32>
    %18 = vector.broadcast %17 : vector<1x128xf32> to vector<16x128xf32>
    %19 = arith.addf %16, %18 : vector<16x128xf32>
    %cst_17 = arith.constant dense<0xFF800000> : vector<16xf32>
    %20 = vector.multi_reduction <maximumf>, %19, %cst_17 [1] : vector<16x128xf32> to vector<16xf32>
    %21 = vector.shape_cast %20 : vector<16xf32> to vector<16x1xf32>
    %22 = vector.broadcast %21 : vector<16x1xf32> to vector<16x128xf32>
    %23 = arith.subf %19, %22 : vector<16x128xf32>
    %24 = math.exp %23 : vector<16x128xf32>
    %cst_18 = arith.constant dense<0.000000e+00> : vector<16xf32>
    %25 = vector.multi_reduction <add>, %24, %cst_18 [1] : vector<16x128xf32> to vector<16xf32>
    %26 = vector.shape_cast %25 : vector<16xf32> to vector<16x1xf32>
    %27 = math.log %26 : vector<16x1xf32>
    %28 = vector.broadcast %27 : vector<16x1xf32> to vector<16x128xf32>
    %29 = arith.subf %23, %28 : vector<16x128xf32>
    %c0_19 = arith.constant 0 : index
    %c0_20 = arith.constant 0 : index
    %30 = vector.load %arg8[%c0_19, %c0_20] : memref<16x128xf32, #tpu.memory_space<vmem>>, vector<16x128xf32>
    tpu.vector_store %arg8[%c0_19, %c0_20], %29 {strides = array<i32>} : memref<16x128xf32, #tpu.memory_space<vmem>>, vector<16x128xf32>,
    return
  }
  func.func @transform_0(%arg0: i32) -> (i32, i32) {
    %c0_i32 = arith.constant 0 : i32
    %c0_i32_0 = arith.constant 0 : i32
    return %arg0, %c0_i32 : i32, i32
  }
  func.func @transform_1(%arg0: i32) -> (i32, i32) {
    %c0_i32 = arith.constant 0 : i32
    %c0_i32_0 = arith.constant 0 : i32
    %c0_i32_1 = arith.constant 0 : i32
    return %c0_i32, %c0_i32_0 : i32, i32
  }
  func.func @transform_2(%arg0: i32) -> (i32, i32) {
    %c0_i32 = arith.constant 0 : i32
    %c0_i32_0 = arith.constant 0 : i32
    %c0_i32_1 = arith.constant 0 : i32
    return %c0_i32, %c0_i32_0 : i32, i32
  }
  func.func @transform_3(%arg0: i32) -> (i32, i32) {
    %c0_i32 = arith.constant 0 : i32
    %c0_i32_0 = arith.constant 0 : i32
    %c0_i32_1 = arith.constant 0 : i32
    return %c0_i32, %c0_i32_0 : i32, i32
  }
  func.func @transform_4(%arg0: i32) -> (i32, i32) {
    %c0_i32 = arith.constant 0 : i32
    %c0_i32_0 = arith.constant 0 : i32
    %c0_i32_1 = arith.constant 0 : i32
    return %c0_i32, %c0_i32_0 : i32, i32
  }
  func.func @transform_5(%arg0: i32) -> (i32, i32) {
    %c0_i32 = arith.constant 0 : i32
    %c0_i32_0 = arith.constant 0 : i32
    %c0_i32_1 = arith.constant 0 : i32
    return %c0_i32, %c0_i32_0 : i32, i32
  }
  func.func @transform_6(%arg0: i32) -> (i32, i32) {
    %c0_i32 = arith.constant 0 : i32
    %c0_i32_0 = arith.constant 0 : i32
    %c0_i32_1 = arith.constant 0 : i32
    return %c0_i32, %c0_i32_0 : i32, i32
  }
  func.func @transform_7(%arg0: i32) -> (i32, i32) {
    %c0_i32 = arith.constant 0 : i32
    %c0_i32_0 = arith.constant 0 : i32
    return %arg0, %c0_i32 : i32, i32
  }
}

</mosaic_0001>

<llo_original>
// kernel: tpu_custom_call.1
$region0: #{tpu_custom_call.1}
  #allocation0 [shape = 'u32[]', space=smem, size = 0x4, offset = 0x4, fixed_abs, tag = 'smem constant byte address 0x4 - core index']
  #allocation1 [shape = 'u32[72,128]{1,0:T(1,128)}', space=vmem, size = 0x9000, scoped, tag = 'internal scratch']
  %s0 = inlined_call_operand.vmem [shape: f32[16,3], index: 0, kind: input, shape index: {}]
  %s1 = inlined_call_operand.vmem [shape: f32[3,64], index: 1, kind: input, shape index: {}]
  %s2 = inlined_call_operand.vmem [shape: f32[1,64], index: 2, kind: input, shape index: {}]
  %s3 = inlined_call_operand.hbm [shape: f32[64,128], index: 3, kind: input, shape index: {}]
  %s4 = inlined_call_operand.vmem [shape: f32[1,128], index: 4, kind: input, shape index: {}]
  %s5 = inlined_call_operand.hbm [shape: f32[128,128], index: 5, kind: input, shape index: {}]
  %s6 = inlined_call_operand.vmem [shape: f32[1,128], index: 6, kind: input, shape index: {}]
  %s7 = inlined_call_operand.hbm [shape: f32[16,128], index: 7, kind: output, shape index: {}]
  %s8 = sld [smem:[#allocation0]]
  $region46: #{tpu_custom_call.1} parent=0
    _
  %s10 = ssub.s32 1, %s8
  %s11 = scalar_select 0, %s10, %s8
  $region1: #{tpu_custom_call.1} parent=0
    #allocation2 [shape = 'u8[32768]{0}', space=vmem, size = 0x8000, scoped, tag = 'input window, operand 3, single buffered']
    #allocation3 [shape = 's32[1]{0}', space=sflag, size = 0x4, scoped, tag = 'scoped memory for tpu_custom_call.1']
    #allocation4 [shape = 's32[1]{0}', space=sflag, size = 0x4, scoped, tag = 'scoped memory for tpu_custom_call.1']
    #allocation5 [shape = 'u8[65536]{0}', space=vmem, size = 0x10000, scoped, tag = 'input window, operand 5, single buffered']
    #allocation6 [shape = 's32[1]{0}', space=sflag, size = 0x4, scoped, tag = 'scoped memory for tpu_custom_call.1']
    #allocation7 [shape = 'u8[8192]{0}', space=vmem, size = 0x2000, scoped, tag = 'output window, operand 0, single buffered']
    %12 = vsyncpa [#allocation3], 0
    %13 = vsyncpa [#allocation6], 0
    %14 = vsyncpa [#allocation4], 0
    // Predicated region
    $region2: #{tpu_custom_call.1} parent=1 // pred_check
      _
    $region3: #{tpu_custom_call.1} parent=1 // pred_check_branch
      %16 = sbr.rel (0) target = $region5
    $region4: #{tpu_custom_call.1} parent=1 // pred_region
      _
    $region5: #{tpu_custom_call.1} parent=1 // pred_fallthru
      _
    // Predicated region
    $region6: #{tpu_custom_call.1} parent=1 // pred_check
      _
    $region7: #{tpu_custom_call.1} parent=1 // pred_check_branch
      %18 = sbr.rel (0) target = $region9
    $region8: #{tpu_custom_call.1} parent=1 // pred_region
      _
    $region9: #{tpu_custom_call.1} parent=1 // pred_fallthru
      _
    // Predicated region
    $region10: #{tpu_custom_call.1} parent=1 // pred_check
      _
    $region11: #{tpu_custom_call.1} parent=1 // pred_check_branch
      %20 = sbr.rel (0) target = $region13
    $region12: #{tpu_custom_call.1} parent=1 // pred_region
      _
    $region13: #{tpu_custom_call.1} parent=1 // pred_fallthru
      _
    // Predicated region
    $region14: #{tpu_custom_call.1} parent=1 // pred_check
      _
    $region15: #{tpu_custom_call.1} parent=1 // pred_check_branch
      %22 = sbr.rel (0) target = $region17
    $region16: #{tpu_custom_call.1} parent=1 // pred_region
      %24 = vsyncadd [#allocation3], 0
      %s25 = sshll.u32 %s3, 4
      %s26 = int_to_ptr.hbm [resolvable:$true] %s25
      %s27 = sshll.u32 [#allocation2], 4
      %s28 = int_to_ptr.vmem [resolvable:$true] %s27
      %33 = dma.hbm_to_vmem [thread:$0]  %s26, 1024, %s28, [#allocation3], 128, 128, 8
    $region17: #{tpu_custom_call.1} parent=1 // pred_fallthru
      _
    // Predicated region
    $region18: #{tpu_custom_call.1} parent=1 // pred_check
      _
    $region19: #{tpu_custom_call.1} parent=1 // pred_check_branch
      %35 = sbr.rel (0) target = $region21
    $region20: #{tpu_custom_call.1} parent=1 // pred_region
      _
    $region21: #{tpu_custom_call.1} parent=1 // pred_fallthru
      _
    // Predicated region
    $region22: #{tpu_custom_call.1} parent=1 // pred_check
      _
    $region23: #{tpu_custom_call.1} parent=1 // pred_check_branch
      %37 = sbr.rel (0) target = $region25
    $region24: #{tpu_custom_call.1} parent=1 // pred_region
      %39 = vsyncadd [#allocation6], 0
      %s40 = sshll.u32 %s5, 4
      %s41 = int_to_ptr.hbm [resolvable:$true] %s40
      %s42 = sshll.u32 [#allocation5], 4
      %s43 = int_to_ptr.vmem [resolvable:$true] %s42
      %48 = dma.hbm_to_vmem [thread:$0]  %s41, 2048, %s43, [#allocation6], 128, 128, 8
    $region25: #{tpu_custom_call.1} parent=1 // pred_fallthru
      _
    // Predicated region
    $region26: #{tpu_custom_call.1} parent=1 // pred_check
      _
    $region27: #{tpu_custom_call.1} parent=1 // pred_check_branch
      %50 = sbr.rel (0) target = $region29
    $region28: #{tpu_custom_call.1} parent=1 // pred_region
      _
    $region29: #{tpu_custom_call.1} parent=1 // pred_fallthru
      _
    // Predicated region
    $region30: #{tpu_custom_call.1} parent=1 // pred_check
      _
    $region31: #{tpu_custom_call.1} parent=1 // pred_check_branch
      %52 = sbr.rel (0) target = $region33
    $region32: #{tpu_custom_call.1} parent=1 // pred_region
      %54 = dma.done [#allocation3], 1024
    $region33: #{tpu_custom_call.1} parent=1 // pred_fallthru
      _
    // Predicated region
    $region34: #{tpu_custom_call.1} parent=1 // pred_check
      _
    $region35: #{tpu_custom_call.1} parent=1 // pred_check_branch
      %56 = sbr.rel (0) target = $region37
    $region36: #{tpu_custom_call.1} parent=1 // pred_region
      %58 = dma.done [#allocation6], 2048
    $region37: #{tpu_custom_call.1} parent=1 // pred_fallthru
      _
    %v59 = vld [vmem:[%s0] sm:$0xff]
    %v60 = vld [vmem:[%s0 + $0x8] sm:$0xff]
    %v61 = vld [vmem:[%s1] sm:$0x7]
    %v62 = vld [vmem:[%s2] sm:$0x1]
    %v64 = vperm.slane %v62, 0
    %vm66 = vcmask 23552
    %v68 = vsel %vm66, %v59, 0
    %v71 = vsel %vm66, %v60, 0
    %vm73 = vcmask 1042432
    %v75 = vsel %vm73, %v61, 0
    %77 = vmatpush.msra.mxu0 0.0
    %78 = vmatpush.msra.mxu0 0.0
    %79 = vmatpush.msra.mxu0 0.0
    %80 = vmatpush.msra.mxu0 0.0
    %81 = vmatpush.msra.mxu0 0.0
    %82 = vmatpush.msra.mxu0 0.0
    %83 = vmatpush.msra.mxu0 0.0
    %84 = vmatpush.msra.mxu0 0.0
    %85 = vmatpush.msra.mxu0 0.0
    %86 = vmatpush.msra.mxu0 0.0
    %87 = vmatpush.msra.mxu0 0.0
    %88 = vmatpush.msra.mxu0 0.0
    %89 = vmatpush.msra.mxu0 0.0
    %90 = vmatpush.msra.mxu0 0.0
    %91 = vmatpush.msra.mxu0 0.0
    %92 = vmatpush.msra.mxu0 %v75
    %93 = vmatmul.f32.gmra.mxu0 %v68
    %v94 = vpop.f32.mrf.mxu0
    %v95 = vadd.f32 %v64, %v94
    %96 = vmatmul.f32.gmra.mxu0 %v71
    %v97 = vpop.f32.mrf.mxu0
    %v98 = vadd.f32 %v64, %v97
    %99 = vdwg.mxu0
    %v100 = vmax.f32 %v95, 0.0
    %v101 = vmax.f32 %v98, 0.0
    %v102 = vld [vmem:[#allocation2] sm:$0xff]
    %v103 = vld [vmem:[#allocation2 + $0x8] sm:$0xff]
    %v104 = vld [vmem:[#allocation2 + $0x10] sm:$0xff]
    %v105 = vld [vmem:[#allocation2 + $0x18] sm:$0xff]
    %v106 = vld [vmem:[#allocation2 + $0x20] sm:$0xff]
    %v107 = vld [vmem:[#allocation2 + $0x28] sm:$0xff]
    %v108 = vld [vmem:[#allocation2 + $0x30] sm:$0xff]
    %v109 = vld [vmem:[#allocation2 + $0x38] sm:$0xff]
    %v110 = vld [vmem:[%s4] sm:$0x1]
    %v112 = vperm.slane %v110, 0
    %vm114 = vcmask 523264
    %v116 = vsel %vm114, %v100, 0
    %v119 = vsel %vm114, %v101, 0
    %121 = vmatpush.msra.mxu0 0.0
    %122 = vmatpush.msra.mxu0 0.0
    %123 = vmatpush.msra.mxu0 0.0
    %124 = vmatpush.msra.mxu0 0.0
    %125 = vmatpush.msra.mxu0 0.0
    %126 = vmatpush.msra.mxu0 0.0
    %127 = vmatpush.msra.mxu0 0.0
    %128 = vmatpush.msra.mxu0 0.0
    %129 = vmatpush.msra.mxu0 %v109
    %130 = vmatpush.msra.mxu0 %v108
    %131 = vmatpush.msra.mxu0 %v107
    %132 = vmatpush.msra.mxu0 %v106
    %133 = vmatpush.msra.mxu0 %v105
    %134 = vmatpush.msra.mxu0 %v104
    %135 = vmatpush.msra.mxu0 %v103
    %136 = vmatpush.msra.mxu0 %v102
    %137 = vmatmul.f32.gmra.mxu0 %v116
    %v138 = vpop.f32.mrf.mxu0
    %v139 = vadd.f32 %v112, %v138
    %140 = vmatmul.f32.gmra.mxu0 %v119
    %v141 = vpop.f32.mrf.mxu0
    %v142 = vadd.f32 %v112, %v141
    %143 = vdwg.mxu0
    %v144 = vmax.f32 %v139, 0.0
    %v145 = vmax.f32 %v142, 0.0
    %v146 = vld [vmem:[#allocation5] sm:$0xff]
    %v147 = vld [vmem:[#allocation5 + $0x8] sm:$0xff]
    %v148 = vld [vmem:[#allocation5 + $0x10] sm:$0xff]
    %v149 = vld [vmem:[#allocation5 + $0x18] sm:$0xff]
    %v150 = vld [vmem:[#allocation5 + $0x20] sm:$0xff]
    %v151 = vld [vmem:[#allocation5 + $0x28] sm:$0xff]
    %v152 = vld [vmem:[#allocation5 + $0x30] sm:$0xff]
    %v153 = vld [vmem:[#allocation5 + $0x38] sm:$0xff]
    %v154 = vld [vmem:[#allocation5 + $0x40] sm:$0xff]
    %v155 = vld [vmem:[#allocation5 + $0x48] sm:$0xff]
    %v156 = vld [vmem:[#allocation5 + $0x50] sm:$0xff]
    %v157 = vld [vmem:[#allocation5 + $0x58] sm:$0xff]
    %v158 = vld [vmem:[#allocation5 + $0x60] sm:$0xff]
    %v159 = vld [vmem:[#allocation5 + $0x68] sm:$0xff]
    %v160 = vld [vmem:[#allocation5 + $0x70] sm:$0xff]
    %v161 = vld [vmem:[#allocation5 + $0x78] sm:$0xff]
    %v162 = vld [vmem:[%s6] sm:$0x1]
    %v164 = vperm.slane %v162, 0
    %166 = vmatpush.msra.mxu0 %v161
    %167 = vmatpush.msra.mxu0 %v160
    %168 = vmatpush.msra.mxu0 %v159
    %169 = vmatpush.msra.mxu0 %v158
    %170 = vmatpush.msra.mxu0 %v157
    %171 = vmatpush.msra.mxu0 %v156
    %172 = vmatpush.msra.mxu0 %v155
    %173 = vmatpush.msra.mxu0 %v154
    %174 = vmatpush.msra.mxu0 %v153
    %175 = vmatpush.msra.mxu0 %v152
    %176 = vmatpush.msra.mxu0 %v151
    %177 = vmatpush.msra.mxu0 %v150
    %178 = vmatpush.msra.mxu0 %v149
    %179 = vmatpush.msra.mxu0 %v148
    %180 = vmatpush.msra.mxu0 %v147
    %181 = vmatpush.msra.mxu0 %v146
    %182 = vmatmul.f32.gmra.mxu0 %v144
    %v183 = vpop.f32.mrf.mxu0
    %v184 = vadd.f32 %v164, %v183
    %185 = vmatmul.f32.gmra.mxu0 %v145
    %v186 = vpop.f32.mrf.mxu0
    %v187 = vadd.f32 %v164, %v186
    %188 = vdwg.mxu0
    %189 = vmax.xlane.f32.xlu0 %v184
    %v190 = vpop.xlane.xlu0 %189
    %191 = vmax.xlane.f32.xlu0 %v187
    %v192 = vpop.xlane.xlu0 %191
    %v193 = vsub.f32 %v184, %v190
    %v194 = vsub.f32 %v187, %v192
    %v195 = vmul.f32 %v193, 1.442695
    %v196 = vpow.pop %v195
    %v197 = vmul.f32 %v194, 1.442695
    %v198 = vpow.pop %v197
    %199 = vadd.xlane.f32.xlu0 %v196
    %v200 = vpop.xlane.xlu0 %199
    %201 = vadd.xlane.f32.xlu0 %v198
    %v202 = vpop.xlane.xlu0 %201
    %v203 = vlog2.pop %v200
    %v204 = vmul.f32 %v203, 0.6931472
    %v205 = vlog2.pop %v202
    %v206 = vmul.f32 %v205, 0.6931472
    %v207 = vsub.f32 %v193, %v204
    %v208 = vsub.f32 %v194, %v206
    %209 = vst [vmem:[#allocation7] sm:$0xff] %v207
    %210 = vst [vmem:[#allocation7 + $0x8] sm:$0xff] %v208
    // Predicated region
    $region38: #{tpu_custom_call.1} parent=1 // pred_check
      _
    $region39: #{tpu_custom_call.1} parent=1 // pred_check_branch
      %212 = sbr.rel (0) target = $region41
    $region40: #{tpu_custom_call.1} parent=1 // pred_region
      %214 = vsyncadd [#allocation4], 0
      %s215 = sshll.u32 [#allocation7], 4
      %s216 = int_to_ptr.vmem [resolvable:$true] %s215
      %s217 = sshll.u32 %s7, 4
      %s218 = int_to_ptr.hbm [resolvable:$true] %s217
      %223 = dma.vmem_to_hbm [thread:$0]  %s216, 256, %s218, [#allocation4], 128, 128, 8
    $region41: #{tpu_custom_call.1} parent=1 // pred_fallthru
      _
    // Predicated region
    $region42: #{tpu_custom_call.1} parent=1 // pred_check
      _
    $region43: #{tpu_custom_call.1} parent=1 // pred_check_branch
      %225 = sbr.rel (0) target = $region45
    $region44: #{tpu_custom_call.1} parent=1 // pred_region
      %227 = dma.done [#allocation4], 256
    $region45: #{tpu_custom_call.1} parent=1 // pred_fallthru
      _
    %228 = vsyncpa [#allocation3], 1
    %229 = vsyncpa [#allocation6], 1
    %230 = vsyncpa [#allocation4], 1

</llo_original>
